<compile_context>
chip_gen: v5e
topology: v5e:2x2
jax: 0.10.0
libtpu: 0.0.40
codegen_flags: <defaults>
</compile_context>

<pallas_src>
import functools

import jax
import jax.numpy as jnp
from jax import lax
from jax.experimental import pallas as pl
from jax.experimental.pallas import tpu as pltpu


def _f1_partial_sums_kernel(y_pred_ref, y_true_ref, tp_ref, sp_ref, sy_ref,
                            *, n_total: int):
    """Per-tile partial sums for the soft-F1 loss.

    y_pred_ref: (C, T) logits, native dtype, classes on sublanes, batch on lanes.
    y_true_ref: (1, T) int32 labels.
    tp_ref/sp_ref/sy_ref: (1, C) float32 per-chunk partial sums:
        tp = sum_batch(onehot * softmax), sp = sum_batch(softmax),
        sy = sum_batch(onehot)  (class counts).
    """
    i = pl.program_id(0)
    logits = y_pred_ref[...].astype(jnp.float32)            # (C, T) f32
    labels = y_true_ref[...]                                 # (1, T) int32
    c, t = logits.shape

    # Mask for the ragged last tile: padded columns must contribute nothing.
    col = i * t + lax.broadcasted_iota(jnp.int32, (1, t), 1)  # (1, T)
    valid = col < n_total                                     # (1, T) bool

    # softmax over the class (sublane) axis — per batch column.
    m = jnp.max(logits, axis=0, keepdims=True)                # (1, T)
    e = jnp.exp(logits - m)                                   # (C, T)
    denom = jnp.sum(e, axis=0, keepdims=True)                 # (1, T)
    p = e * pl.reciprocal(denom, approx=True)                 # (C, T)
    p = jnp.where(valid, p, 0.0)                              # zero padded cols

    # one-hot(y_true) along the class axis, zeroed on padded columns.
    cls = lax.broadcasted_iota(jnp.int32, (c, t), 0)          # (C, T)
    y = jnp.where(jnp.logical_and(labels == cls, valid), 1.0, 0.0)

    # Per-class partial sums over the batch (lane) axis.
    tp_ref[...] = jnp.sum(y * p, axis=1).reshape(1, c)
    sp_ref[...] = jnp.sum(p, axis=1).reshape(1, c)
    sy_ref[...] = jnp.sum(y, axis=1).reshape(1, c)


def f1_loss(y_pred: jax.Array, y_true: jax.Array,
            epsilon: float = 1e-7, tile_n: int = 512) -> jax.Array:
    """Pallas TPU implementation of F1Loss.forward.

    y_pred: (N, C) logits (any float dtype; upcast to f32 inside the kernel)
    y_true: (N,)   integer class ids in [0, C)
    returns scalar float32 loss = 1 - mean_c(clamped soft-F1_c)
    """
    assert y_pred.ndim == 2
    assert y_true.ndim == 1
    n, c = y_pred.shape

    # Batch-axis tile (lane axis after the transpose): either the full batch
    # (small N) or a multiple of 128.
    if n <= tile_n:
        tile = n
    else:
        tile = max(128, (tile_n // 128) * 128)
    num_chunks = pl.cdiv(n, tile)

    # Lane-dense presentation: classes -> sublanes, batch -> lanes.
    # (Layout plumbing only; no f32 cast of y_pred here.)
    y_pred_t = y_pred.T                                       # (C, N)
    y_true_row = y_true.astype(jnp.int32).reshape(1, n)       # (1, N)

    out_shapes = (
        jax.ShapeDtypeStruct((num_chunks, c), jnp.float32),   # tp partials
        jax.ShapeDtypeStruct((num_chunks, c), jnp.float32),   # sum(p) partials
        jax.ShapeDtypeStruct((num_chunks, c), jnp.float32),   # sum(y) partials
    )
    tp_p, sp_p, sy_p = pl.pallas_call(
        functools.partial(_f1_partial_sums_kernel, n_total=n),
        out_shape=out_shapes,
        grid=(num_chunks,),
        in_specs=[
            pl.BlockSpec((c, tile), lambda i: (0, i)),
            pl.BlockSpec((1, tile), lambda i: (0, i)),
        ],
        out_specs=(
            pl.BlockSpec((1, c), lambda i: (i, 0)),
            pl.BlockSpec((1, c), lambda i: (i, 0)),
            pl.BlockSpec((1, c), lambda i: (i, 0)),
        ),
        compiler_params=pltpu.CompilerParams(
            dimension_semantics=("parallel",),
            vmem_limit_bytes=32 * 1024 * 1024,
        ),
    )(y_pred_t, y_true_row)

    # Tiny epilogue (num_chunks x C values) in plain JAX: combine partials and
    # finalize precision / recall / F1 / clamp / mean.
    tp = jnp.sum(tp_p, axis=0)
    sp = jnp.sum(sp_p, axis=0)
    sy = jnp.sum(sy_p, axis=0)
    fp = sp - tp                      # sum((1-y)*p) = sum(p) - tp
    fn = sy - tp                      # sum(y*(1-p)) = count(y) - tp
    precision = tp / (tp + fp + epsilon)
    recall = tp / (tp + fn + epsilon)
    f1 = 2.0 * (precision * recall) / (precision + recall + epsilon)
    f1 = jnp.clip(f1, epsilon, 1.0 - epsilon)
    return (1.0 - jnp.mean(f1)).astype(jnp.float32)


def _f1_loss_ref(y_pred, y_true, classes, epsilon=1e-7):
    """Pure-JAX reference mirroring the PyTorch module."""
    y = jax.nn.one_hot(y_true, classes, dtype=jnp.float32)
    p = jax.nn.softmax(y_pred.astype(jnp.float32), axis=1)
    tp = jnp.sum(y * p, axis=0)
    fp = jnp.sum((1.0 - y) * p, axis=0)
    fn = jnp.sum(y * (1.0 - p), axis=0)
    precision = tp / (tp + fp + epsilon)
    recall = tp / (tp + fn + epsilon)
    f1 = 2.0 * (precision * recall) / (precision + recall + epsilon)
    f1 = jnp.clip(f1, epsilon, 1.0 - epsilon)
    return 1.0 - jnp.mean(f1)


if __name__ == "__main__":
    CLASSES = 18
    key = jax.random.PRNGKey(0)
    k1, k2, k3, k4 = jax.random.split(key, 4)

    # Case 1: tiny single-tile batch (tile == full batch axis).
    yp1 = jax.random.normal(k1, (16, CLASSES), dtype=jnp.float32)
    yt1 = jax.random.randint(k2, (16,), 0, CLASSES, dtype=jnp.int32)
    out1 = f1_loss(yp1, yt1)
    jax.block_until_ready(out1)
    ref1 = _f1_loss_ref(yp1, yt1, CLASSES)
    assert jnp.allclose(out1, ref1, atol=1e-3, rtol=1e-3), (out1, ref1)

    # Case 2: multi-tile grid with a ragged last tile
    # (300 rows, tile 128 -> 3 chunks, last one masked; exercises the
    #  parallel partial-sum path + in-kernel masking).
    yp2 = jax.random.normal(k3, (300, CLASSES), dtype=jnp.float32)
    yt2 = jax.random.randint(k4, (300,), 0, CLASSES, dtype=jnp.int32)
    out2 = f1_loss(yp2, yt2, tile_n=128)
    jax.block_until_ready(out2)
    ref2 = _f1_loss_ref(yp2, yt2, CLASSES)
    assert jnp.allclose(out2, ref2, atol=1e-3, rtol=1e-3), (out2, ref2)

    # Case 3: native bf16 logits DMA'd without a wrapper f32 cast.
    yp3 = yp2.astype(jnp.bfloat16)
    out3 = f1_loss(yp3, yt2, tile_n=128)
    jax.block_until_ready(out3)
    ref3 = _f1_loss_ref(yp3, yt2, CLASSES)
    assert jnp.allclose(out3, ref3, atol=2e-3, rtol=2e-3), (out3, ref3)

    print("KERNEL_OK")
</pallas_src>

<mosaic_0001>
module attributes {stable_mosaic.version = 11 : i64} {
  func.func @_f1_partial_sums_kernel(%arg0: i32, %arg1: memref<18x16xf32, #tpu.memory_space<vmem>>, %arg2: memref<1x16xi32, #tpu.memory_space<vmem>>, %arg3: memref<1x18xf32, #tpu.memory_space<vmem>>, %arg4: memref<1x18xf32, #tpu.memory_space<vmem>>, %arg5: memref<1x18xf32, #tpu.memory_space<vmem>>) attributes {dimension_semantics = [#tpu.dimension_semantics<parallel>], iteration_bounds = array<i64: 1>, scalar_prefetch = 0 : i64, scratch_operands = 0 : i64, tpu.core_type = #tpu.core_type<tc>, window_params = [{transform_indices = @transform_0, window_bounds = array<i64: 18, 16>}, {transform_indices = @transform_1, window_bounds = array<i64: 1, 16>}, {transform_indices = @transform_2, window_bounds = array<i64: 1, 18>}, {transform_indices = @transform_3, window_bounds = array<i64: 1, 18>}, {transform_indices = @transform_4, window_bounds = array<i64: 1, 18>}]} {
    %c0 = arith.constant 0 : index
    %c0_0 = arith.constant 0 : index
    %0 = vector.load %arg1[%c0, %c0_0] : memref<18x16xf32, #tpu.memory_space<vmem>>, vector<18x16xf32>
    %c0_1 = arith.constant 0 : index
    %c0_2 = arith.constant 0 : index
    %1 = vector.load %arg2[%c0_1, %c0_2] : memref<1x16xi32, #tpu.memory_space<vmem>>, vector<1x16xi32>
    %c16_i32 = arith.constant 16 : i32
    %2 = arith.muli %arg0, %c16_i32 : i32
    %3 = tpu.iota {dimensions = array<i32: 1>} : vector<1x16xi32>
    %4 = vector.broadcast %2 : i32 to vector<1x16xi32>
    %5 = arith.addi %4, %3 : vector<1x16xi32>
    %c16_i32_3 = arith.constant 16 : i32
    %6 = vector.broadcast %c16_i32_3 : i32 to vector<1x16xi32>
    %7 = arith.cmpi slt, %5, %6 : vector<1x16xi32>
    %cst = arith.constant dense<0xFF800000> : vector<16xf32>
    %8 = vector.multi_reduction <maximumf>, %0, %cst [0] : vector<18x16xf32> to vector<16xf32>
    %9 = vector.shape_cast %8 : vector<16xf32> to vector<1x16xf32>
    %10 = vector.broadcast %9 : vector<1x16xf32> to vector<18x16xf32>
    %11 = arith.subf %0, %10 : vector<18x16xf32>
    %12 = math.exp %11 : vector<18x16xf32>
    %cst_4 = arith.constant dense<0.000000e+00> : vector<16xf32>
    %13 = vector.multi_reduction <add>, %12, %cst_4 [0] : vector<18x16xf32> to vector<16xf32>
    %14 = vector.shape_cast %13 : vector<16xf32> to vector<1x16xf32>
    %15 = tpu.reciprocal %14 {approx = true} : vector<1x16xf32> -> vector<1x16xf32>
    %16 = vector.broadcast %15 : vector<1x16xf32> to vector<18x16xf32>
    %17 = arith.mulf %12, %16 : vector<18x16xf32>
    %cst_5 = arith.constant 0.000000e+00 : f32
    %18 = vector.shape_cast %7 : vector<1x16xi1> to vector<1x16xi1>
    %19 = vector.broadcast %18 : vector<1x16xi1> to vector<18x16xi1>
    %20 = vector.broadcast %cst_5 : f32 to vector<18x16xf32>
    %21 = arith.select %19, %17, %20 : vector<18x16xi1>, vector<18x16xf32>
    %22 = tpu.iota {dimensions = array<i32: 0>} : vector<18x16xi32>
    %23 = vector.broadcast %1 : vector<1x16xi32> to vector<18x16xi32>
    %24 = arith.cmpi eq, %23, %22 : vector<18x16xi32>
    %25 = vector.broadcast %7 : vector<1x16xi1> to vector<18x16xi1>
    %26 = arith.andi %24, %25 : vector<18x16xi1>
    %cst_6 = arith.constant 1.000000e+00 : f32
    %cst_7 = arith.constant 0.000000e+00 : f32
    %27 = vector.broadcast %cst_6 : f32 to vector<18x16xf32>
    %28 = vector.broadcast %cst_7 : f32 to vector<18x16xf32>
    %29 = arith.select %26, %27, %28 : vector<18x16xi1>, vector<18x16xf32>
    %30 = arith.mulf %29, %21 : vector<18x16xf32>
    %cst_8 = arith.constant dense<0.000000e+00> : vector<18xf32>
    %31 = vector.multi_reduction <add>, %30, %cst_8 [1] : vector<18x16xf32> to vector<18xf32>
    %32 = vector.shape_cast %31 : vector<18xf32> to vector<1x18xf32>
    %c0_9 = arith.constant 0 : index
    %c0_10 = arith.constant 0 : index
    %33 = vector.load %arg3[%c0_9, %c0_10] : memref<1x18xf32, #tpu.memory_space<vmem>>, vector<1x18xf32>
    tpu.vector_store %arg3[%c0_9, %c0_10], %32 {strides = array<i32>} : memref<1x18xf32, #tpu.memory_space<vmem>>, vector<1x18xf32>,
    %cst_11 = arith.constant dense<0.000000e+00> : vector<18xf32>
    %34 = vector.multi_reduction <add>, %21, %cst_11 [1] : vector<18x16xf32> to vector<18xf32>
    %35 = vector.shape_cast %34 : vector<18xf32> to vector<1x18xf32>
    %c0_12 = arith.constant 0 : index
    %c0_13 = arith.constant 0 : index
    %36 = vector.load %arg4[%c0_12, %c0_13] : memref<1x18xf32, #tpu.memory_space<vmem>>, vector<1x18xf32>
    tpu.vector_store %arg4[%c0_12, %c0_13], %35 {strides = array<i32>} : memref<1x18xf32, #tpu.memory_space<vmem>>, vector<1x18xf32>,
    %cst_14 = arith.constant dense<0.000000e+00> : vector<18xf32>
    %37 = vector.multi_reduction <add>, %29, %cst_14 [1] : vector<18x16xf32> to vector<18xf32>
    %38 = vector.shape_cast %37 : vector<18xf32> to vector<1x18xf32>
    %c0_15 = arith.constant 0 : index
    %c0_16 = arith.constant 0 : index
    %39 = vector.load %arg5[%c0_15, %c0_16] : memref<1x18xf32, #tpu.memory_space<vmem>>, vector<1x18xf32>
    tpu.vector_store %arg5[%c0_15, %c0_16], %38 {strides = array<i32>} : memref<1x18xf32, #tpu.memory_space<vmem>>, vector<1x18xf32>,
    return
  }
  func.func @transform_0(%arg0: i32) -> (i32, i32) {
    %c0_i32 = arith.constant 0 : i32
    %c0_i32_0 = arith.constant 0 : i32
    return %c0_i32, %arg0 : i32, i32
  }
  func.func @transform_1(%arg0: i32) -> (i32, i32) {
    %c0_i32 = arith.constant 0 : i32
    %c0_i32_0 = arith.constant 0 : i32
    return %c0_i32, %arg0 : i32, i32
  }
  func.func @transform_2(%arg0: i32) -> (i32, i32) {
    %c0_i32 = arith.constant 0 : i32
    %c0_i32_0 = arith.constant 0 : i32
    return %arg0, %c0_i32 : i32, i32
  }
  func.func @transform_3(%arg0: i32) -> (i32, i32) {
    %c0_i32 = arith.constant 0 : i32
    %c0_i32_0 = arith.constant 0 : i32
    return %arg0, %c0_i32 : i32, i32
  }
  func.func @transform_4(%arg0: i32) -> (i32, i32) {
    %c0_i32 = arith.constant 0 : i32
    %c0_i32_0 = arith.constant 0 : i32
    return %arg0, %c0_i32 : i32, i32
  }
}

</mosaic_0001>

<llo_original>
// kernel: tpu_custom_call.1
$region0: #{tpu_custom_call.1}
  #allocation0 [shape = 'u32[]', space=smem, size = 0x4, offset = 0x4, fixed_abs, tag = 'smem constant byte address 0x4 - core index']
  #allocation1 [shape = 'u32[72,128]{1,0:T(1,128)}', space=vmem, size = 0x9000, scoped, tag = 'internal scratch']
  %s0 = inlined_call_operand.vmem [shape: f32[18,16], index: 0, kind: input, shape index: {}]
  %s1 = inlined_call_operand.vmem [shape: s32[1,16], index: 1, kind: input, shape index: {}]
  %s2 = inlined_call_operand.hbm [shape: f32[1,18], index: 2, kind: output, shape index: {0}]
  %s3 = inlined_call_operand.hbm [shape: f32[1,18], index: 3, kind: output, shape index: {1}]
  %s4 = inlined_call_operand.hbm [shape: f32[1,18], index: 4, kind: output, shape index: {2}]
  %5 = xla_tuple %s2, %s3, %s4
  %s6 = sld [smem:[#allocation0]]
  $region34: #{tpu_custom_call.1} parent=0
    _
  %s8 = ssub.s32 1, %s6
  %s9 = scalar_select 0, %s8, %s6
  $region1: #{tpu_custom_call.1} parent=0
    #allocation2 [shape = 'u8[512]{0}', space=vmem, size = 0x400, scoped, tag = 'output window, operand 0, single buffered']
    #allocation3 [shape = 's32[1]{0}', space=sflag, size = 0x4, scoped, tag = 'scoped memory for tpu_custom_call.1']
    #allocation4 [shape = 'u8[512]{0}', space=vmem, size = 0x400, scoped, tag = 'output window, operand 1, single buffered']
    #allocation5 [shape = 's32[1]{0}', space=sflag, size = 0x4, scoped, tag = 'scoped memory for tpu_custom_call.1']
    #allocation6 [shape = 'u8[512]{0}', space=vmem, size = 0x400, scoped, tag = 'output window, operand 2, single buffered']
    %10 = vsyncpa [#allocation3], 0
    %11 = vsyncpa [#allocation5], 0
    // Predicated region
    $region2: #{tpu_custom_call.1} parent=1 // pred_check
      _
    $region3: #{tpu_custom_call.1} parent=1 // pred_check_branch
      %13 = sbr.rel (0) target = $region5
    $region4: #{tpu_custom_call.1} parent=1 // pred_region
      _
    $region5: #{tpu_custom_call.1} parent=1 // pred_fallthru
      _
    // Predicated region
    $region6: #{tpu_custom_call.1} parent=1 // pred_check
      _
    $region7: #{tpu_custom_call.1} parent=1 // pred_check_branch
      %15 = sbr.rel (0) target = $region9
    $region8: #{tpu_custom_call.1} parent=1 // pred_region
      _
    $region9: #{tpu_custom_call.1} parent=1 // pred_fallthru
      _
    %v16 = vld [vmem:[%s0] sm:$0xff]
    %v17 = vld [vmem:[%s0 + $0x8] sm:$0xff]
    %v18 = vld [vmem:[%s0 + $0x10] sm:$0x3]
    %v19 = vld [vmem:[%s1] sm:$0x1]
    %s20 = smul.u32 0, 16
    %v21 = vlaneseq
    %v22 = vand.u32 %v21, 127
    %v23 = vstv %s20
    %v24 = vadd.s32 %v23, %v22
    %vm25 = vcmp.lt.s32.totalorder %v24, 16
    %vm26 = vcmask 130048
    %v27 = vsel %vm26, %v16, -inf
    %v28 = vsel %vm26, %v17, -inf
    %vm29 = vcmask 123904
    %v30 = vsel %vm29, %v18, -inf
    %v31 = vmax.f32 %v27, %v28
    %v32 = vmax.f32 %v31, %v30
    %v33 = vrot.slane %v32, 4
    %v34 = vmax.f32 %v32, %v33
    %v35 = vrot.slane %v34, 2
    %v36 = vmax.f32 %v34, %v35
    %v37 = vrot.slane %v36, 1
    %v38 = vmax.f32 %v36, %v37
    %v39 = vsub.f32 %v16, %v38
    %v40 = vsub.f32 %v17, %v38
    %v41 = vsub.f32 %v18, %v38
    %v42 = vmul.f32 %v39, 1.442695
    %v43 = vpow.pop %v42
    %v44 = vmul.f32 %v40, 1.442695
    %v45 = vpow.pop %v44
    %v46 = vmul.f32 %v41, 1.442695
    %v47 = vpow.pop %v46
    %v48 = vsel %vm26, %v43, 0.0
    %v49 = vsel %vm26, %v45, 0.0
    %v50 = vadd.f32 %v48, %v49
    %v51 = vsel %vm29, %v47, 0.0
    %v52 = vadd.f32 %v50, %v51
    %v53 = vrot.slane %v52, 4
    %v54 = vadd.f32 %v52, %v53
    %v55 = vrot.slane %v54, 2
    %v56 = vadd.f32 %v54, %v55
    %v57 = vrot.slane %v56, 1
    %v58 = vadd.f32 %v56, %v57
    %v59 = vrcp.pop %v58
    %v60 = vmul.f32 %v43, %v59
    %v61 = vmul.f32 %v45, %v59
    %v62 = vmul.f32 %v47, %v59
    %v63 = vsel %vm25, 1, 0
    %vm64 = vcmp.eq.s32.totalorder %v63, 1
    %v65 = vsel %vm64, %v60, 0.0
    %v66 = vsel %vm64, %v61, 0.0
    %v67 = vsel %vm64, %v62, 0.0
    %v68 = vlaneseq
    %v69 = vshrl.u32 %v68, 7
    %v70 = vadd.s32 %v69, 8
    %v71 = vadd.s32 %v69, 16
    %v72 = vperm.slane %v19, 0
    %vm73 = vcmp.eq.s32.totalorder %v72, %v69
    %vm74 = vcmp.eq.s32.totalorder %v72, %v70
    %vm75 = vcmp.eq.s32.totalorder %v72, %v71
    %vm76 = vmand %vm73, %vm64
    %vm77 = vmand %vm74, %vm64
    %vm78 = vmand %vm75, %vm64
    %v79 = vsel %vm76, 1.0, 0.0
    %v80 = vsel %vm77, 1.0, 0.0
    %v81 = vsel %vm78, 1.0, 0.0
    %v82 = vmul.f32 %v79, %v65
    %v83 = vmul.f32 %v80, %v66
    %v84 = vmul.f32 %v81, %v67
    %v85 = vsel %vm26, %v82, 0.0
    %86 = vadd.xlane.f32.xlu0 %v85
    %v87 = vpop.xlane.xlu0 %86
    %v88 = vsel %vm26, %v83, 0.0
    %89 = vadd.xlane.f32.xlu0 %v88
    %v90 = vpop.xlane.xlu0 %89
    %v91 = vsel %vm29, %v84, 0.0
    %92 = vadd.xlane.f32.xlu0 %v91
    %v93 = vpop.xlane.xlu0 %92
    %v97 = vperm.slane %v87, %v22
    %v98 = vadd.s32 %v22, 4294967288
    %v99 = vperm.slane %v90, %v98
    %vm100 = vcmask 130112
    %v101 = vsel %vm100, %v99, %v97
    %v102 = vadd.s32 %v22, 4294967280
    %v103 = vperm.slane %v93, %v102
    %vm104 = vcmask 195712
    %v105 = vsel %vm104, %v103, %v101
    %vm107 = vcmask 139264
    %108 = vst.msk [vmem:[#allocation2] sm:$0x1] %vm107, %v105
    %v109 = vsel %vm26, %v65, 0.0
    %110 = vadd.xlane.f32.xlu0 %v109
    %v111 = vpop.xlane.xlu0 %110
    %v112 = vsel %vm26, %v66, 0.0
    %113 = vadd.xlane.f32.xlu0 %v112
    %v114 = vpop.xlane.xlu0 %113
    %v115 = vsel %vm29, %v67, 0.0
    %116 = vadd.xlane.f32.xlu0 %v115
    %v117 = vpop.xlane.xlu0 %116
    %v121 = vperm.slane %v111, %v22
    %v122 = vperm.slane %v114, %v98
    %v123 = vsel %vm100, %v122, %v121
    %v124 = vperm.slane %v117, %v102
    %v125 = vsel %vm104, %v124, %v123
    %127 = vst.msk [vmem:[#allocation4] sm:$0x1] %vm107, %v125
    %v128 = vsel %vm26, %v79, 0.0
    %129 = vadd.xlane.f32.xlu0 %v128
    %v130 = vpop.xlane.xlu0 %129
    %v131 = vsel %vm26, %v80, 0.0
    %132 = vadd.xlane.f32.xlu0 %v131
    %v133 = vpop.xlane.xlu0 %132
    %v134 = vsel %vm29, %v81, 0.0
    %135 = vadd.xlane.f32.xlu0 %v134
    %v136 = vpop.xlane.xlu0 %135
    %v140 = vperm.slane %v130, %v22
    %v141 = vperm.slane %v133, %v98
    %v142 = vsel %vm100, %v141, %v140
    %v143 = vperm.slane %v136, %v102
    %v144 = vsel %vm104, %v143, %v142
    %146 = vst.msk [vmem:[#allocation6] sm:$0x1] %vm107, %v144
    // Predicated region
    $region10: #{tpu_custom_call.1} parent=1 // pred_check
      _
    $region11: #{tpu_custom_call.1} parent=1 // pred_check_branch
      %148 = sbr.rel (0) target = $region13
    $region12: #{tpu_custom_call.1} parent=1 // pred_region
      %150 = vsyncadd [#allocation3], 0
      %s152 = sshll.u32 [#allocation2], 4
      %s153 = int_to_ptr.vmem [resolvable:$true] %s152
      %s154 = sshll.u32 %s2, 4
      %s155 = int_to_ptr.hbm [resolvable:$true] %s154
      %157 = dma.vmem_to_hbm [thread:$0]  %s153, 16, %s155, [#allocation3]
    $region13: #{tpu_custom_call.1} parent=1 // pred_fallthru
      _
    // Predicated region
    $region14: #{tpu_custom_call.1} parent=1 // pred_check
      _
    $region15: #{tpu_custom_call.1} parent=1 // pred_check_branch
      %159 = sbr.rel (0) target = $region17
    $region16: #{tpu_custom_call.1} parent=1 // pred_region
      %161 = vsyncadd [#allocation5], 0
      %s163 = sshll.u32 [#allocation4], 4
      %s164 = int_to_ptr.vmem [resolvable:$true] %s163
      %s165 = sshll.u32 %s3, 4
      %s166 = int_to_ptr.hbm [resolvable:$true] %s165
      %168 = dma.vmem_to_hbm [thread:$0]  %s164, 16, %s166, [#allocation5]
    $region17: #{tpu_custom_call.1} parent=1 // pred_fallthru
      _
    // Predicated region
    $region18: #{tpu_custom_call.1} parent=1 // pred_check
      _
    $region19: #{tpu_custom_call.1} parent=1 // pred_check_branch
      %170 = sbr.rel (0) target = $region21
    $region20: #{tpu_custom_call.1} parent=1 // pred_region
      %172 = vsyncadd [#allocation5], 0
      %s174 = sshll.u32 [#allocation6], 4
      %s175 = int_to_ptr.vmem [resolvable:$true] %s174
      %s176 = sshll.u32 %s4, 4
      %s177 = int_to_ptr.hbm [resolvable:$true] %s176
      %179 = dma.vmem_to_hbm [thread:$0]  %s175, 16, %s177, [#allocation5]
    $region21: #{tpu_custom_call.1} parent=1 // pred_fallthru
      _
    // Predicated region
    $region22: #{tpu_custom_call.1} parent=1 // pred_check
      _
    $region23: #{tpu_custom_call.1} parent=1 // pred_check_branch
      %181 = sbr.rel (0) target = $region25
    $region24: #{tpu_custom_call.1} parent=1 // pred_region
      %183 = dma.done [#allocation3], 16
    $region25: #{tpu_custom_call.1} parent=1 // pred_fallthru
      _
    // Predicated region
    $region26: #{tpu_custom_call.1} parent=1 // pred_check
      _
    $region27: #{tpu_custom_call.1} parent=1 // pred_check_branch
      %185 = sbr.rel (0) target = $region29
    $region28: #{tpu_custom_call.1} parent=1 // pred_region
      %187 = dma.done [#allocation5], 16
    $region29: #{tpu_custom_call.1} parent=1 // pred_fallthru
      _
    // Predicated region
    $region30: #{tpu_custom_call.1} parent=1 // pred_check
      _
    $region31: #{tpu_custom_call.1} parent=1 // pred_check_branch
      %189 = sbr.rel (0) target = $region33
    $region32: #{tpu_custom_call.1} parent=1 // pred_region
      %191 = dma.done [#allocation5], 16
    $region33: #{tpu_custom_call.1} parent=1 // pred_fallthru
      _
    %192 = vsyncpa [#allocation3], 1
    %193 = vsyncpa [#allocation5], 1

</llo_original>
